<compile_context>
chip_gen: v6e
topology: v6e:2x2x1
jax: 0.10.0
libtpu: 0.0.40
codegen_flags: <defaults>
</compile_context>

<pallas_src>
import jax
import jax.numpy as jnp
from jax import lax
from jax.experimental import pallas as pl
from jax.experimental.pallas import tpu as pltpu


def _make_ffn_kernel(hchunk, nchunks, use_scratch):
    """Build the FFN kernel body.

    Refs:
      x_ref  : (tm, d_in)
      w1_ref : (d_in, th)      with th = nchunks * hchunk
      b1_ref : (1, th)
      w2_ref : (th, d_in)
      b2_ref : (1, d_in)
      o_ref  : (tm, d_in)
      acc_ref: (tm, d_in) f32 scratch (only when use_scratch).  For float32
               outputs the kernel accumulates directly into o_ref, which stays
               resident across the hidden-dim (k) reduction because its block
               index ignores k.
    """

    def kernel(x_ref, w1_ref, b1_ref, w2_ref, b2_ref, o_ref, *scratch):
        acc_ref = scratch[0] if use_scratch else o_ref
        k = pl.program_id(1)

        @pl.when(k == 0)
        def _init():
            # Fuse b2 into the accumulator init: removes both the zero-fill and
            # the full (tm, d_in) epilogue add.
            acc_ref[...] = jnp.broadcast_to(
                b2_ref[...], acc_ref.shape
            ).astype(acc_ref.dtype)

        x = x_ref[...]

        def chunk(c, carry):
            # Sub-chunk the hidden block so the bias/ReLU/cast VALU work of
            # chunk c co-issues with the MXU matmul of chunk c+1.
            off = c * hchunk
            if not isinstance(off, int):
                off = pl.multiple_of(off, hchunk)
            h = jnp.dot(
                x, w1_ref[:, pl.ds(off, hchunk)],
                preferred_element_type=jnp.float32,
            )
            h = jnp.maximum(
                h + b1_ref[:, pl.ds(off, hchunk)].astype(jnp.float32), 0.0
            )
            acc_ref[...] += jnp.dot(
                h.astype(x.dtype), w2_ref[pl.ds(off, hchunk), :],
                preferred_element_type=jnp.float32,
            ).astype(acc_ref.dtype)
            return carry

        if nchunks == 1:
            chunk(0, 0)
        else:
            lax.fori_loop(0, nchunks, chunk, 0, unroll=True)

        if use_scratch:
            @pl.when(k == pl.num_programs(1) - 1)
            def _finalize():
                o_ref[...] = acc_ref[...].astype(o_ref.dtype)

    return kernel


def _vmem_capacity_bytes():
    try:
        info = pltpu.get_tpu_info()
        cap = int(getattr(info, "vmem_capacity_bytes", 0))
        if cap > 0:
            return cap
    except Exception:
        pass
    return 64 << 20  # conservative default: v7x per-TensorCore VMEM


def _pick_hidden_chunk(th):
    """Sub-chunk of the hidden block used inside the kernel (MXU/VALU overlap)."""
    if th > 256 and th % 256 == 0:
        return 256
    if th > 128 and th % 128 == 0:
        return 128
    return th


def positionwise_feed_forward(x, w1, b1, w2, b2, *, tm=None, th=None):
    """x: [..., d_in] -> [..., d_in]; computes relu(x @ w1 + b1) @ w2 + b2.

    Weights are stored transposed vs. torch.nn.Linear:
      w1: [d_in, d_hid], b1: [d_hid], w2: [d_hid, d_in], b2: [d_in].
    """
    d_in = x.shape[-1]
    d_hid = w1.shape[-1]
    lead = x.shape[:-1]
    M = 1
    for s in lead:
        M *= s

    # ---- lane-align the hidden dim: pad to a multiple of 128 with zeros.
    # Padded units compute relu(x @ 0 + 0) = 0 and multiply zero rows of W2,
    # contributing exactly zero to the output.
    d_hid_p = max(128, ((d_hid + 127) // 128) * 128)
    if d_hid_p != d_hid:
        pad = d_hid_p - d_hid
        w1 = jnp.pad(w1, ((0, 0), (0, pad)))
        b1 = jnp.pad(jnp.reshape(b1, (-1,)), (0, pad))
        w2 = jnp.pad(w2, ((0, pad), (0, 0)))
    x2 = x.reshape(M, d_in)
    b1_2d = jnp.reshape(b1, (1, d_hid_p))
    b2_2d = jnp.reshape(b2, (1, d_in))

    itemsize = jnp.dtype(x.dtype).itemsize
    w_itemsize = jnp.dtype(w1.dtype).itemsize
    use_scratch = x.dtype != jnp.float32  # f32 accumulates directly into o_ref

    cap = _vmem_capacity_bytes()
    budget = (cap * 7) // 8  # leave ~12.5% headroom for Mosaic internal scratch

    def vmem_needed(tm_, th_, hc_, nbuf_w):
        n = 2 * tm_ * d_in * itemsize                        # x tiles (double-buffered)
        n += 2 * tm_ * d_in * itemsize                       # out tiles
        if use_scratch:
            n += tm_ * d_in * 4                              # f32 accumulator scratch
        n += nbuf_w * (2 * d_in * th_ + th_) * w_itemsize    # W1, W2, b1 blocks
        n += d_in * w_itemsize                               # b2 (resident)
        n += tm_ * hc_ * (4 + itemsize)                      # h (f32) + its cast copy
        return n

    # ---- row tile: biggest tile that fits; multiple row steps for large M so
    # the "parallel" axis can shard across TensorCores (megacore / v7x).
    if tm is not None:
        tm_cands = [min(tm, M)]
    elif M <= 256:
        tm_cands = [M]
    elif M >= 1024:
        tm_cands = [512, 256, 128]
    else:
        tm_cands = [256, 128]

    # ---- hidden tile: prefer th == d_hid_p (weights fully resident).  Only
    # split the hidden dim (and re-stream weight blocks per row tile) when the
    # weights genuinely do not fit the VMEM budget.
    if th is not None and d_hid_p % th == 0:
        th_cands = [th]
    else:
        th_cands = [c for c in range(d_hid_p, 127, -128) if d_hid_p % c == 0]
        if not th_cands:
            th_cands = [d_hid_p]

    chosen = None
    for tm_c in tm_cands:
        tm_c = min(tm_c, M)
        for th_c in th_cands:
            hc_c = _pick_hidden_chunk(th_c)
            nbuf = 1 if th_c == d_hid_p else 2
            if vmem_needed(tm_c, th_c, hc_c, nbuf) <= budget:
                chosen = (tm_c, th_c, hc_c)
                break
        if chosen is not None:
            break
    if chosen is None:
        # Nothing fits the budget: take the smallest candidate config and let
        # the compiler report a genuine OOM if it still cannot place it.
        tm_c = min(tm_cands[-1], M)
        th_c = th_cands[-1]
        chosen = (tm_c, th_c, _pick_hidden_chunk(th_c))
    tm, th, hc = chosen

    num_k = d_hid_p // th
    weights_resident = num_k == 1
    nchunks = th // hc
    grid = (pl.cdiv(M, tm), num_k)
    n_row_tiles = -(-M // tm)

    nbuf_w = 1 if weights_resident else 2
    needed = vmem_needed(tm, th, hc, nbuf_w)
    vmem_limit = max(needed + (8 << 20), 32 << 20)
    vmem_limit = int(min(vmem_limit, cap - (2 << 20)))

    # Honest cost estimate: when the hidden dim is split, the full weight
    # matrices are re-streamed from HBM once per row tile.
    w_restream = 1 if weights_resident else n_row_tiles
    flops = 4 * M * d_in * d_hid_p
    bytes_accessed = int(
        2 * M * d_in * itemsize
        + w_restream * (w1.size + w2.size + b1_2d.size) * w_itemsize
        + b2_2d.size * w_itemsize
    )

    if weights_resident:
        # Whole weight arrays live in VMEM for the entire kernel: one HBM read,
        # single-buffered, no per-grid-step weight DMA.
        w1_spec = pl.BlockSpec(memory_space=pltpu.MemorySpace.VMEM)
        b1_spec = pl.BlockSpec(memory_space=pltpu.MemorySpace.VMEM)
        w2_spec = pl.BlockSpec(memory_space=pltpu.MemorySpace.VMEM)
    else:
        w1_spec = pl.BlockSpec((d_in, th), lambda i, k: (0, k))
        b1_spec = pl.BlockSpec((1, th), lambda i, k: (0, k))
        w2_spec = pl.BlockSpec((th, d_in), lambda i, k: (k, 0))
    b2_spec = pl.BlockSpec(memory_space=pltpu.MemorySpace.VMEM)

    scratch_shapes = [pltpu.VMEM((tm, d_in), jnp.float32)] if use_scratch else []
    kernel = _make_ffn_kernel(hc, nchunks, use_scratch)

    out = pl.pallas_call(
        kernel,
        out_shape=jax.ShapeDtypeStruct((M, d_in), x.dtype),
        grid_spec=pltpu.PrefetchScalarGridSpec(
            num_scalar_prefetch=0,
            grid=grid,
            in_specs=[
                pl.BlockSpec((tm, d_in), lambda i, k: (i, 0)),  # x tile
                w1_spec,
                b1_spec,
                w2_spec,
                b2_spec,
            ],
            out_specs=pl.BlockSpec((tm, d_in), lambda i, k: (i, 0)),
            scratch_shapes=scratch_shapes,
        ),
        compiler_params=pltpu.CompilerParams(
            dimension_semantics=("parallel", "arbitrary"),
            vmem_limit_bytes=vmem_limit,
        ),
        cost_estimate=pl.CostEstimate(
            flops=flops, transcendentals=0, bytes_accessed=bytes_accessed
        ),
    )(x2, w1, b1_2d, w2, b2_2d)

    return out.reshape(*lead, d_in)


def init_params(key, d_in, d_hid, dtype=jnp.float32):
    """Deterministic init matching nn.Linear shapes (weights stored transposed)."""
    k1, k2, k3, k4 = jax.random.split(key, 4)
    lim1 = 1.0 / jnp.sqrt(jnp.float32(d_in))
    lim2 = 1.0 / jnp.sqrt(jnp.float32(d_hid))
    w1 = jax.random.uniform(k1, (d_in, d_hid), dtype, -lim1, lim1)   # = W1_pt.T
    b1 = jax.random.uniform(k2, (d_hid,), dtype, -lim1, lim1)
    w2 = jax.random.uniform(k3, (d_hid, d_in), dtype, -lim2, lim2)   # = W2_pt.T
    b2 = jax.random.uniform(k4, (d_in,), dtype, -lim2, lim2)
    return w1, b1, w2, b2


if __name__ == "__main__":
    d_in, d_hid = 32, 64
    batch, seq = 2, 8

    key = jax.random.PRNGKey(0)
    kx, kp = jax.random.split(key)
    x = jax.random.normal(kx, (batch, seq, d_in), jnp.float32)
    w1, b1, w2, b2 = init_params(kp, d_in, d_hid)

    out = positionwise_feed_forward(x, w1, b1, w2, b2)
    out = jax.block_until_ready(out)

    # Pure-JAX reference of the same semantics (w_2(relu(w_1(x)))).
    ref = jnp.maximum(x @ w1 + b1, 0.0) @ w2 + b2
    assert out.shape == x.shape
    max_err = float(jnp.max(jnp.abs(out - ref)))
    assert jnp.allclose(out, ref, atol=1e-5, rtol=1e-5), max_err

    print("KERNEL_OK")
</pallas_src>

<mosaic_0001>
module attributes {stable_mosaic.version = 11 : i64} {
  func.func @kernel(%arg0: i32, %arg1: i32, %arg2: memref<16x32xf32, #tpu.memory_space<vmem>>, %arg3: memref<32x128xf32, #tpu.memory_space<vmem>>, %arg4: memref<1x128xf32, #tpu.memory_space<vmem>>, %arg5: memref<128x32xf32, #tpu.memory_space<vmem>>, %arg6: memref<1x32xf32, #tpu.memory_space<vmem>>, %arg7: memref<16x32xf32, #tpu.memory_space<vmem>>) attributes {dimension_semantics = [#tpu.dimension_semantics<parallel>, #tpu.dimension_semantics<arbitrary>], iteration_bounds = array<i64: 1, 1>, scalar_prefetch = 0 : i64, scratch_operands = 0 : i64, tpu.core_type = #tpu.core_type<tc>, window_params = [{transform_indices = @transform_0, window_bounds = array<i64: 16, 32>}, {pipeline_mode = #tpu.pipeline_mode<synchronous>, transform_indices = @transform_1, window_bounds = array<i64: 32, 128>}, {pipeline_mode = #tpu.pipeline_mode<synchronous>, transform_indices = @transform_2, window_bounds = array<i64: 1, 128>}, {pipeline_mode = #tpu.pipeline_mode<synchronous>, transform_indices = @transform_3, window_bounds = array<i64: 128, 32>}, {pipeline_mode = #tpu.pipeline_mode<synchronous>, transform_indices = @transform_4, window_bounds = array<i64: 1, 32>}, {transform_indices = @transform_5, window_bounds = array<i64: 16, 32>}]} {
    %c0_i32 = arith.constant 0 : i32
    %0 = arith.cmpi eq, %arg1, %c0_i32 : i32
    %1 = arith.extui %0 : i1 to i32
    %c0_i32_0 = arith.constant 0 : i32
    %2 = arith.cmpi ne, %1, %c0_i32_0 : i32
    scf.if %2 {
      %c0_14 = arith.constant 0 : index
      %c0_15 = arith.constant 0 : index
      %16 = vector.load %arg6[%c0_14, %c0_15] : memref<1x32xf32, #tpu.memory_space<vmem>>, vector<1x32xf32>
      %17 = vector.shape_cast %16 : vector<1x32xf32> to vector<1x32xf32>
      %18 = vector.broadcast %17 : vector<1x32xf32> to vector<16x32xf32>
      %c0_16 = arith.constant 0 : index
      %c0_17 = arith.constant 0 : index
      %19 = vector.load %arg7[%c0_16, %c0_17] : memref<16x32xf32, #tpu.memory_space<vmem>>, vector<16x32xf32>
      tpu.vector_store %arg7[%c0_16, %c0_17], %18 {strides = array<i32>} : memref<16x32xf32, #tpu.memory_space<vmem>>, vector<16x32xf32>,
    } else {
    }
    %c0 = arith.constant 0 : index
    %c0_1 = arith.constant 0 : index
    %3 = vector.load %arg2[%c0, %c0_1] : memref<16x32xf32, #tpu.memory_space<vmem>>, vector<16x32xf32>
    %c0_2 = arith.constant 0 : index
    %c0_3 = arith.constant 0 : index
    %4 = vector.load %arg3[%c0_2, %c0_3] : memref<32x128xf32, #tpu.memory_space<vmem>>, vector<32x128xf32>
    %cst = arith.constant dense<0.000000e+00> : vector<16x128xf32>
    %5 = tpu.matmul %3, %4, %cst {dimension_numbers = #tpu.dot_dimension_numbers<[1], [0], [0], [1], [0, 0, 1, 1], [], []>} : vector<16x32xf32>, vector<32x128xf32>, vector<16x128xf32> -> vector<16x128xf32>
    %c0_4 = arith.constant 0 : index
    %c0_5 = arith.constant 0 : index
    %6 = vector.load %arg4[%c0_4, %c0_5] : memref<1x128xf32, #tpu.memory_space<vmem>>, vector<1x128xf32>
    %7 = vector.broadcast %6 : vector<1x128xf32> to vector<16x128xf32>
    %8 = arith.addf %5, %7 : vector<16x128xf32>
    %cst_6 = arith.constant 0.000000e+00 : f32
    %9 = vector.broadcast %cst_6 : f32 to vector<16x128xf32>
    %10 = arith.maximumf %8, %9 : vector<16x128xf32>
    %c0_7 = arith.constant 0 : index
    %c0_8 = arith.constant 0 : index
    %11 = vector.load %arg7[%c0_7, %c0_8] : memref<16x32xf32, #tpu.memory_space<vmem>>, vector<16x32xf32>
    %c0_9 = arith.constant 0 : index
    %c0_10 = arith.constant 0 : index
    %12 = vector.load %arg5[%c0_9, %c0_10] : memref<128x32xf32, #tpu.memory_space<vmem>>, vector<128x32xf32>
    %cst_11 = arith.constant dense<0.000000e+00> : vector<16x32xf32>
    %13 = tpu.matmul %10, %12, %cst_11 {dimension_numbers = #tpu.dot_dimension_numbers<[1], [0], [0], [1], [0, 0, 1, 1], [], []>} : vector<16x128xf32>, vector<128x32xf32>, vector<16x32xf32> -> vector<16x32xf32>
    %14 = arith.addf %11, %13 : vector<16x32xf32>
    %c0_12 = arith.constant 0 : index
    %c0_13 = arith.constant 0 : index
    %15 = vector.load %arg7[%c0_12, %c0_13] : memref<16x32xf32, #tpu.memory_space<vmem>>, vector<16x32xf32>
    tpu.vector_store %arg7[%c0_12, %c0_13], %14 {strides = array<i32>} : memref<16x32xf32, #tpu.memory_space<vmem>>, vector<16x32xf32>,
    return
  }
  func.func @transform_0(%arg0: i32, %arg1: i32) -> (i32, i32) {
    %c0_i32 = arith.constant 0 : i32
    %c0_i32_0 = arith.constant 0 : i32
    return %arg0, %c0_i32 : i32, i32
  }
  func.func @transform_1(%arg0: i32, %arg1: i32) -> (i32, i32) {
    %c0_i32 = arith.constant 0 : i32
    %c0_i32_0 = arith.constant 0 : i32
    %c0_i32_1 = arith.constant 0 : i32
    return %c0_i32, %c0_i32_0 : i32, i32
  }
  func.func @transform_2(%arg0: i32, %arg1: i32) -> (i32, i32) {
    %c0_i32 = arith.constant 0 : i32
    %c0_i32_0 = arith.constant 0 : i32
    %c0_i32_1 = arith.constant 0 : i32
    return %c0_i32, %c0_i32_0 : i32, i32
  }
  func.func @transform_3(%arg0: i32, %arg1: i32) -> (i32, i32) {
    %c0_i32 = arith.constant 0 : i32
    %c0_i32_0 = arith.constant 0 : i32
    %c0_i32_1 = arith.constant 0 : i32
    return %c0_i32, %c0_i32_0 : i32, i32
  }
  func.func @transform_4(%arg0: i32, %arg1: i32) -> (i32, i32) {
    %c0_i32 = arith.constant 0 : i32
    %c0_i32_0 = arith.constant 0 : i32
    %c0_i32_1 = arith.constant 0 : i32
    return %c0_i32, %c0_i32_0 : i32, i32
  }
  func.func @transform_5(%arg0: i32, %arg1: i32) -> (i32, i32) {
    %c0_i32 = arith.constant 0 : i32
    %c0_i32_0 = arith.constant 0 : i32
    return %arg0, %c0_i32 : i32, i32
  }
}

</mosaic_0001>

<llo_original>
// kernel: tpu_custom_call.1
$region0: #{tpu_custom_call.1}
  #allocation0 [shape = 'u32[]', space=smem, size = 0x4, offset = 0x4, fixed_abs, tag = 'smem constant byte address 0x4 - core index']
  #allocation1 [shape = 'u32[144,128]{1,0:T(1,128)}', space=vmem, size = 0x12000, scoped, tag = 'internal scratch']
  %s0 = inlined_call_operand.vmem [shape: f32[16,32], index: 0, kind: input, shape index: {}]
  %s1 = inlined_call_operand.vmem [shape: f32[32,128], index: 1, kind: input, shape index: {}]
  %s2 = inlined_call_operand.vmem [shape: f32[1,128], index: 2, kind: input, shape index: {}]
  %s3 = inlined_call_operand.vmem [shape: f32[128,32], index: 3, kind: input, shape index: {}]
  %s4 = inlined_call_operand.vmem [shape: f32[1,32], index: 4, kind: input, shape index: {}]
  %s5 = inlined_call_operand.hbm [shape: f32[16,32], index: 5, kind: output, shape index: {}]
  %s6 = sld [smem:[#allocation0]]
  $region34: #{tpu_custom_call.1} parent=0
    _
  %s8 = ssub.s32 1, %s6
  %s9 = scalar_select 0, %s8, %s6
  $region1: #{tpu_custom_call.1} parent=0
    #allocation2 [shape = 'u8[8192]{0}', space=vmem, size = 0x2000, scoped, tag = 'output window, operand 0, single buffered']
    #allocation3 [shape = 's32[1]{0}', space=sflag, size = 0x4, scoped, tag = 'scoped memory for tpu_custom_call.1']
    %10 = vsyncpa [#allocation3], 0
    // Predicated region
    $region2: #{tpu_custom_call.1} parent=1 // pred_check
      _
    $region3: #{tpu_custom_call.1} parent=1 // pred_check_branch
      %12 = sbr.rel (0) target = $region5
    $region4: #{tpu_custom_call.1} parent=1 // pred_region
      _
    $region5: #{tpu_custom_call.1} parent=1 // pred_fallthru
      _
    // Predicated region
    $region6: #{tpu_custom_call.1} parent=1 // pred_check
      _
    $region7: #{tpu_custom_call.1} parent=1 // pred_check_branch
      %14 = sbr.rel (0) target = $region9
    $region8: #{tpu_custom_call.1} parent=1 // pred_region
      _
    $region9: #{tpu_custom_call.1} parent=1 // pred_fallthru
      _
    // Predicated region
    $region10: #{tpu_custom_call.1} parent=1 // pred_check
      _
    $region11: #{tpu_custom_call.1} parent=1 // pred_check_branch
      %16 = sbr.rel (0) target = $region13
    $region12: #{tpu_custom_call.1} parent=1 // pred_region
      _
    $region13: #{tpu_custom_call.1} parent=1 // pred_fallthru
      _
    // Predicated region
    $region14: #{tpu_custom_call.1} parent=1 // pred_check
      _
    $region15: #{tpu_custom_call.1} parent=1 // pred_check_branch
      %18 = sbr.rel (0) target = $region17
    $region16: #{tpu_custom_call.1} parent=1 // pred_region
      _
    $region17: #{tpu_custom_call.1} parent=1 // pred_fallthru
      _
    // Predicated region
    $region18: #{tpu_custom_call.1} parent=1 // pred_check
      _
    $region19: #{tpu_custom_call.1} parent=1 // pred_check_branch
      %20 = sbr.rel (0) target = $region21
    $region20: #{tpu_custom_call.1} parent=1 // pred_region
      _
    $region21: #{tpu_custom_call.1} parent=1 // pred_fallthru
      _
    %p21 = scmp.eq.s32.totalorder 0, 0
    // Predicated region
    $region22: #{tpu_custom_call.1} parent=1 // pred_check
      %p22 = pneg %p21
    $region23: #{tpu_custom_call.1} parent=1 // pred_check_branch
      %24 = sbr.rel (%p22) target = $region25
    $region24: #{tpu_custom_call.1} parent=1 // pred_region
      %v25 = vld [vmem:[%s4] sm:$0x1]
      %v27 = vlaneseq
      %v28 = vshrl.u32 %v27, 7
      %v29 = vsub.s32 0, %v28
      %v30 = vrot.slane %v25, %v29
      %vm32 = vcmask 261120
      %33 = vst.msk [vmem:[#allocation2] sm:$0xff] %vm32, %v30
      %34 = vst.msk [vmem:[#allocation2 + $0x8] sm:$0xff] %vm32, %v30
    $region25: #{tpu_custom_call.1} parent=1 // pred_fallthru
      _
    %v35 = vld [vmem:[%s0] sm:$0xff]
    %v36 = vld [vmem:[%s0 + $0x8] sm:$0xff]
    %v37 = vld [vmem:[%s1] sm:$0xff]
    %v38 = vld [vmem:[%s1 + $0x8] sm:$0xff]
    %v39 = vld [vmem:[%s1 + $0x10] sm:$0xff]
    %v40 = vld [vmem:[%s1 + $0x18] sm:$0xff]
    %v41 = vld [vmem:[%s2] sm:$0x1]
    %v43 = vlaneseq
    %v44 = vshrl.u32 %v43, 7
    %v45 = vsub.s32 0, %v44
    %v46 = vrot.slane %v41, %v45
    %vm48 = vcmask 261120
    %v50 = vsel %vm48, %v35, 0
    %v53 = vsel %vm48, %v36, 0
    %55 = vmatprep.subr.mxu0 0.0
    %56 = vmatpush1.msra.mxu0 0.0
    %57 = vmatprep.subr.mxu0 0.0
    %58 = vmatpush1.msra.mxu0 0.0
    %59 = vmatprep.subr.mxu0 0.0
    %60 = vmatpush1.msra.mxu0 0.0
    %61 = vmatprep.subr.mxu0 0.0
    %62 = vmatpush1.msra.mxu0 0.0
    %63 = vmatprep.subr.mxu0 0.0
    %64 = vmatpush1.msra.mxu0 0.0
    %65 = vmatprep.subr.mxu0 0.0
    %66 = vmatpush1.msra.mxu0 0.0
    %67 = vmatprep.subr.mxu0 0.0
    %68 = vmatpush1.msra.mxu0 0.0
    %69 = vmatprep.subr.mxu0 0.0
    %70 = vmatpush1.msra.mxu0 0.0
    %71 = vmatprep.subr.mxu0 0.0
    %72 = vmatpush1.msra.mxu0 0.0
    %73 = vmatprep.subr.mxu0 0.0
    %74 = vmatpush1.msra.mxu0 0.0
    %75 = vmatprep.subr.mxu0 0.0
    %76 = vmatpush1.msra.mxu0 0.0
    %77 = vmatprep.subr.mxu0 0.0
    %78 = vmatpush1.msra.mxu0 0.0
    %79 = vmatprep.subr.mxu0 0.0
    %80 = vmatpush1.msra.mxu0 %v40
    %81 = vmatprep.subr.mxu0 0.0
    %82 = vmatpush1.msra.mxu0 %v39
    %83 = vmatprep.subr.mxu0 0.0
    %84 = vmatpush1.msra.mxu0 %v38
    %85 = vmatprep.subr.mxu0 0.0
    %86 = vmatpush1.msra.mxu0 %v37
    %87 = vmatprep.subr.mxu0 0.0
    %88 = vmatpush2.msra.mxu0 0.0
    %89 = vmatprep.subr.mxu0 0.0
    %90 = vmatpush2.msra.mxu0 0.0
    %91 = vmatprep.subr.mxu0 0.0
    %92 = vmatpush2.msra.mxu0 0.0
    %93 = vmatprep.subr.mxu0 0.0
    %94 = vmatpush2.msra.mxu0 0.0
    %95 = vmatprep.subr.mxu0 0.0
    %96 = vmatpush2.msra.mxu0 0.0
    %97 = vmatprep.subr.mxu0 0.0
    %98 = vmatpush2.msra.mxu0 0.0
    %99 = vmatprep.subr.mxu0 0.0
    %100 = vmatpush2.msra.mxu0 0.0
    %101 = vmatprep.subr.mxu0 0.0
    %102 = vmatpush2.msra.mxu0 0.0
    %103 = vmatprep.subr.mxu0 0.0
    %104 = vmatpush2.msra.mxu0 0.0
    %105 = vmatprep.subr.mxu0 0.0
    %106 = vmatpush2.msra.mxu0 0.0
    %107 = vmatprep.subr.mxu0 0.0
    %108 = vmatpush2.msra.mxu0 0.0
    %109 = vmatprep.subr.mxu0 0.0
    %110 = vmatpush2.msra.mxu0 0.0
    %111 = vmatprep.subr.mxu0 0.0
    %112 = vmatpush2.msra.mxu0 0.0
    %113 = vmatprep.subr.mxu0 0.0
    %114 = vmatpush2.msra.mxu0 0.0
    %115 = vmatprep.subr.mxu0 0.0
    %116 = vmatpush2.msra.mxu0 0.0
    %117 = vmatprep.subr.mxu0 0.0
    %118 = vmatpush2.msra.mxu0 0.0
    %119 = vmatprep.mubr.f32.mxu0 0.0
    %120 = vmatmul.mubr.f32.gmra.mxu0 %v50
    %v121 = vpop.f32.mrf.mxu0
    %v122 = vadd.f32 %v46, %v121
    %v123 = vpop.f32.mrf.mxu0
    %124 = vmatprep.mubr.f32.mxu0 0.0
    %125 = vmatmul.mubr.f32.gmra.mxu0 %v53
    %v126 = vpop.f32.mrf.mxu0
    %v127 = vadd.f32 %v46, %v126
    %v128 = vpop.f32.mrf.mxu0
    %129 = vdwg.mxu0
    %v130 = vmax.f32 %v122, 0.0
    %v131 = vmax.f32 %v127, 0.0
    %v132 = vld [vmem:[#allocation2] sm:$0xff]
    %v133 = vld [vmem:[#allocation2 + $0x8] sm:$0xff]
    %v134 = vld [vmem:[%s3] sm:$0xff]
    %v135 = vld [vmem:[%s3 + $0x8] sm:$0xff]
    %v136 = vld [vmem:[%s3 + $0x10] sm:$0xff]
    %v137 = vld [vmem:[%s3 + $0x18] sm:$0xff]
    %v138 = vld [vmem:[%s3 + $0x20] sm:$0xff]
    %v139 = vld [vmem:[%s3 + $0x28] sm:$0xff]
    %v140 = vld [vmem:[%s3 + $0x30] sm:$0xff]
    %v141 = vld [vmem:[%s3 + $0x38] sm:$0xff]
    %v142 = vld [vmem:[%s3 + $0x40] sm:$0xff]
    %v143 = vld [vmem:[%s3 + $0x48] sm:$0xff]
    %v144 = vld [vmem:[%s3 + $0x50] sm:$0xff]
    %v145 = vld [vmem:[%s3 + $0x58] sm:$0xff]
    %v146 = vld [vmem:[%s3 + $0x60] sm:$0xff]
    %v147 = vld [vmem:[%s3 + $0x68] sm:$0xff]
    %v148 = vld [vmem:[%s3 + $0x70] sm:$0xff]
    %v149 = vld [vmem:[%s3 + $0x78] sm:$0xff]
    %150 = vmatprep.subr.mxu0 0.0
    %151 = vmatpush1.msra.mxu0 %v149
    %152 = vmatprep.subr.mxu0 0.0
    %153 = vmatpush1.msra.mxu0 %v148
    %154 = vmatprep.subr.mxu0 0.0
    %155 = vmatpush1.msra.mxu0 %v147
    %156 = vmatprep.subr.mxu0 0.0
    %157 = vmatpush1.msra.mxu0 %v146
    %158 = vmatprep.subr.mxu0 0.0
    %159 = vmatpush1.msra.mxu0 %v145
    %160 = vmatprep.subr.mxu0 0.0
    %161 = vmatpush1.msra.mxu0 %v144
    %162 = vmatprep.subr.mxu0 0.0
    %163 = vmatpush1.msra.mxu0 %v143
    %164 = vmatprep.subr.mxu0 0.0
    %165 = vmatpush1.msra.mxu0 %v142
    %166 = vmatprep.subr.mxu0 0.0
    %167 = vmatpush1.msra.mxu0 %v141
    %168 = vmatprep.subr.mxu0 0.0
    %169 = vmatpush1.msra.mxu0 %v140
    %170 = vmatprep.subr.mxu0 0.0
    %171 = vmatpush1.msra.mxu0 %v139
    %172 = vmatprep.subr.mxu0 0.0
    %173 = vmatpush1.msra.mxu0 %v138
    %174 = vmatprep.subr.mxu0 0.0
    %175 = vmatpush1.msra.mxu0 %v137
    %176 = vmatprep.subr.mxu0 0.0
    %177 = vmatpush1.msra.mxu0 %v136
    %178 = vmatprep.subr.mxu0 0.0
    %179 = vmatpush1.msra.mxu0 %v135
    %180 = vmatprep.subr.mxu0 0.0
    %181 = vmatpush1.msra.mxu0 %v134
    %182 = vmatprep.subr.mxu0 0.0
    %183 = vmatpush2.msra.mxu0 0.0
    %184 = vmatprep.subr.mxu0 0.0
    %185 = vmatpush2.msra.mxu0 0.0
    %186 = vmatprep.subr.mxu0 0.0
    %187 = vmatpush2.msra.mxu0 0.0
    %188 = vmatprep.subr.mxu0 0.0
    %189 = vmatpush2.msra.mxu0 0.0
    %190 = vmatprep.subr.mxu0 0.0
    %191 = vmatpush2.msra.mxu0 0.0
    %192 = vmatprep.subr.mxu0 0.0
    %193 = vmatpush2.msra.mxu0 0.0
    %194 = vmatprep.subr.mxu0 0.0
    %195 = vmatpush2.msra.mxu0 0.0
    %196 = vmatprep.subr.mxu0 0.0
    %197 = vmatpush2.msra.mxu0 0.0
    %198 = vmatprep.subr.mxu0 0.0
    %199 = vmatpush2.msra.mxu0 0.0
    %200 = vmatprep.subr.mxu0 0.0
    %201 = vmatpush2.msra.mxu0 0.0
    %202 = vmatprep.subr.mxu0 0.0
    %203 = vmatpush2.msra.mxu0 0.0
    %204 = vmatprep.subr.mxu0 0.0
    %205 = vmatpush2.msra.mxu0 0.0
    %206 = vmatprep.subr.mxu0 0.0
    %207 = vmatpush2.msra.mxu0 0.0
    %208 = vmatprep.subr.mxu0 0.0
    %209 = vmatpush2.msra.mxu0 0.0
    %210 = vmatprep.subr.mxu0 0.0
    %211 = vmatpush2.msra.mxu0 0.0
    %212 = vmatprep.subr.mxu0 0.0
    %213 = vmatpush2.msra.mxu0 0.0
    %214 = vmatprep.mubr.f32.mxu0 0.0
    %215 = vmatmul.mubr.f32.gmra.mxu0 %v130
    %v216 = vpop.f32.mrf.mxu0
    %v217 = vadd.f32 0.0, %v216
    %v218 = vpop.f32.mrf.mxu0
    %219 = vmatprep.mubr.f32.mxu0 0.0
    %220 = vmatmul.mubr.f32.gmra.mxu0 %v131
    %v221 = vpop.f32.mrf.mxu0
    %v222 = vadd.f32 0.0, %v221
    %v223 = vpop.f32.mrf.mxu0
    %224 = vdwg.mxu0
    %v225 = vadd.f32 %v132, %v217
    %v226 = vadd.f32 %v133, %v222
    %227 = vst.msk [vmem:[#allocation2] sm:$0xff] %vm48, %v225
    %228 = vst.msk [vmem:[#allocation2 + $0x8] sm:$0xff] %vm48, %v226
    // Predicated region
    $region26: #{tpu_custom_call.1} parent=1 // pred_check
      _
    $region27: #{tpu_custom_call.1} parent=1 // pred_check_branch
      %230 = sbr.rel (0) target = $region29
    $region28: #{tpu_custom_call.1} parent=1 // pred_region
      %s232 = ssub.s32 256, 256
      %233 = vsyncadd [#allocation3], %s232
      %s234 = sshll.u32 [#allocation2], 4
      %s235 = int_to_ptr.vmem [resolvable:$true] %s234
      %240 = dma.vmem_to_hbm [thread:$0]  %s235, 256, %s5, [#allocation3], 128, 128, 8
    $region29: #{tpu_custom_call.1} parent=1 // pred_fallthru
      _
    // Predicated region
    $region30: #{tpu_custom_call.1} parent=1 // pred_check
      _
    $region31: #{tpu_custom_call.1} parent=1 // pred_check_branch
      %242 = sbr.rel (0) target = $region33
    $region32: #{tpu_custom_call.1} parent=1 // pred_region
      %243 = dma.done [#allocation3], 256
    $region33: #{tpu_custom_call.1} parent=1 // pred_fallthru
      _
    %244 = vsyncpa [#allocation3], 1

</llo_original>
